<compile_context>
chip_gen: v7x
topology: tpu7x:2x2x1
jax: 0.10.0
libtpu: 0.0.40
codegen_flags: <defaults>
</compile_context>

<pallas_src>
import jax
import jax.numpy as jnp
from jax import lax
from jax.experimental import pallas as pl
from jax.experimental.pallas import tpu as pltpu

LANE = 128            # TPU lane width; sample axis is laid out row-major over (row, lane)
SUBLANES = 8          # sublane alignment for the row axis
MAX_BLOCK_ROWS = 64   # 64 rows * 128 lanes = 8192 samples per grid step


def _coxph_kernel(ind_ref, y_ref, tri_ref, loss_ref, acc_ref):
    # ind_ref, y_ref : (BR, 128) float32 VMEM, sorted by descending event_time,
    #                  flattened row-major (row * 128 + lane = sorted sample index).
    # tri_ref        : (128, 128) float32 VMEM, tri[k, j] = 1 iff k <= j.
    # loss_ref       : (1, 1) float32 SMEM output.
    # acc_ref        : (2,) float32 SMEM scratch: [0] = running sum(exp) of previous
    #                  blocks, [1] = running loss accumulator.
    step = pl.program_id(0)

    @pl.when(step == 0)
    def _init():
        acc_ref[0] = jnp.float32(0.0)
        acc_ref[1] = jnp.float32(0.0)

    y = y_ref[...]          # (BR, 128)
    ind = ind_ref[...]      # (BR, 128)
    tri = tri_ref[...]      # (128, 128)

    e = jnp.exp(y)          # matches reference: no max-subtraction

    # Within-row inclusive cumsum along the lane axis via one MXU matmul:
    # cs[r, j] = sum_{k <= j} e[r, k]
    cs = jnp.dot(e, tri, preferred_element_type=jnp.float32)          # (BR, 128)

    br = y.shape[0]
    if br > 1:
        # Exclusive prefix of per-row totals across rows, also via MXU matmuls
        # (keeps everything on well-supported dot ops; MXU is otherwise idle).
        ones_l = jnp.ones((y.shape[1], y.shape[1]), jnp.float32)       # (128, 128)
        row_bcast = jnp.dot(e, ones_l,
                            preferred_element_type=jnp.float32)        # (BR,128): row_tot[r]
        r_out = lax.broadcasted_iota(jnp.int32, (br, br), 0)
        r_in = lax.broadcasted_iota(jnp.int32, (br, br), 1)
        strict = (r_in < r_out).astype(jnp.float32)                    # (BR, BR) strict lower
        prefix = jnp.dot(strict, row_bcast,
                         preferred_element_type=jnp.float32)           # (BR,128) excl. prefix
        cs = cs + prefix

    # Carry the sum(exp) of all previous grid steps.
    cs = cs + acc_ref[0]

    term = ind * (y - jnp.log(cs))                                     # (BR, 128)
    acc_ref[1] = acc_ref[1] - jnp.sum(term)
    acc_ref[0] = acc_ref[0] + jnp.sum(e)

    @pl.when(step == pl.num_programs(0) - 1)
    def _finalize():
        loss_ref[0, 0] = acc_ref[1]


def coxph_loss(event_indicator, event_time, outputs):
    """JAX/Pallas CoxPHLoss.forward. All inputs are 1-D of length N."""
    n = outputs.shape[0]

    # Glue: sort by descending event_time (data-dependent gather stays in JAX).
    # TODO(synk): argsort/gather is done host-side in JAX; no clean Pallas equivalent.
    order = jnp.argsort(-event_time)
    y = outputs[order].astype(jnp.float32)
    ind = event_indicator[order].astype(jnp.float32)

    # Layout: pad sample axis and reshape to (rows, 128), rows sublane-aligned.
    rows = -(-n // LANE)
    rows = -(-rows // SUBLANES) * SUBLANES
    if rows <= MAX_BLOCK_ROWS:
        br = rows                                  # single block == full array
    else:
        br = MAX_BLOCK_ROWS
        rows = -(-rows // br) * br
    npad = rows * LANE
    grid = rows // br

    y = jnp.pad(y, (0, npad - n)).reshape(rows, LANE)
    ind = jnp.pad(ind, (0, npad - n)).reshape(rows, LANE)

    # Fixed 128x128 lower-triangular-ones constant (k <= j), built once outside.
    k_idx = lax.broadcasted_iota(jnp.int32, (LANE, LANE), 0)
    j_idx = lax.broadcasted_iota(jnp.int32, (LANE, LANE), 1)
    tri = (k_idx <= j_idx).astype(jnp.float32)

    loss = pl.pallas_call(
        _coxph_kernel,
        out_shape=jax.ShapeDtypeStruct((1, 1), jnp.float32),
        grid=(grid,),
        in_specs=[
            pl.BlockSpec((br, LANE), lambda i: (i, 0)),
            pl.BlockSpec((br, LANE), lambda i: (i, 0)),
            pl.BlockSpec((LANE, LANE), lambda i: (0, 0)),
        ],
        out_specs=pl.BlockSpec((1, 1), lambda i: (0, 0),
                               memory_space=pltpu.MemorySpace.SMEM),
        scratch_shapes=[pltpu.SMEM((2,), jnp.float32)],
        compiler_params=pltpu.CompilerParams(
            dimension_semantics=("arbitrary",)),
        cost_estimate=pl.CostEstimate(
            flops=2 * npad * LANE + 2 * npad * LANE + 8 * npad,
            transcendentals=2 * npad,
            bytes_accessed=2 * npad * 4 + LANE * LANE * 4 + 4),
    )(ind, y, tri)
    return loss[0, 0]


def _coxph_loss_ref(event_indicator, event_time, outputs):
    # Pure-JAX reference mirroring the PyTorch module.
    order = jnp.argsort(-event_time)
    y = outputs[order].astype(jnp.float32)
    ind = event_indicator[order].astype(jnp.float32)
    return -jnp.sum(ind * (y - jnp.log(jnp.cumsum(jnp.exp(y)))))


if __name__ == "__main__":
    key = jax.random.PRNGKey(0)

    # Small primary test (N = 8 samples).
    k1, k2, k3 = jax.random.split(key, 3)
    N = 8
    event_indicator = (jax.random.uniform(k1, (N,)) < 0.6).astype(jnp.float32)
    event_time = jax.random.uniform(k2, (N,), minval=0.0, maxval=10.0)
    outputs = jax.random.normal(k3, (N,), dtype=jnp.float32)

    loss = jax.block_until_ready(coxph_loss(event_indicator, event_time, outputs))
    ref = jax.block_until_ready(_coxph_loss_ref(event_indicator, event_time, outputs))
    assert jnp.allclose(loss, ref, rtol=1e-4, atol=1e-4), (loss, ref)

    # Secondary test exercising the multi-row blocked cumsum path (N = 300).
    k4, k5, k6 = jax.random.split(jax.random.PRNGKey(1), 3)
    N2 = 300
    ei2 = (jax.random.uniform(k4, (N2,)) < 0.6).astype(jnp.float32)
    et2 = jax.random.uniform(k5, (N2,), minval=0.0, maxval=10.0)
    out2 = jax.random.normal(k6, (N2,), dtype=jnp.float32)

    loss2 = jax.block_until_ready(coxph_loss(ei2, et2, out2))
    ref2 = jax.block_until_ready(_coxph_loss_ref(ei2, et2, out2))
    assert jnp.allclose(loss2, ref2, rtol=1e-4, atol=1e-3), (loss2, ref2)

    print("KERNEL_OK")
</pallas_src>

<mosaic_0001>
module attributes {stable_mosaic.version = 11 : i64} {
  func.func @_coxph_kernel(%arg0: i32, %arg1: memref<8x128xf32, #tpu.memory_space<vmem>>, %arg2: memref<8x128xf32, #tpu.memory_space<vmem>>, %arg3: memref<128x128xf32, #tpu.memory_space<vmem>>, %arg4: memref<1x1xf32, #tpu.memory_space<smem>>, %arg5: memref<2xf32, #tpu.memory_space<smem>>) attributes {dimension_semantics = [#tpu.dimension_semantics<arbitrary>], iteration_bounds = array<i64: 1>, scalar_prefetch = 0 : i64, scratch_operands = 1 : i64, tpu.core_type = #tpu.core_type<tc>, window_params = [{transform_indices = @transform_0, window_bounds = array<i64: 8, 128>}, {transform_indices = @transform_1, window_bounds = array<i64: 8, 128>}, {pipeline_mode = #tpu.pipeline_mode<synchronous>, transform_indices = @transform_2, window_bounds = array<i64: 128, 128>}, {transform_indices = @transform_3, window_bounds = array<i64: 1, 1>}]} {
    %c0_i32 = arith.constant 0 : i32
    %0 = arith.cmpi eq, %arg0, %c0_i32 : i32
    %1 = arith.extui %0 : i1 to i32
    %c0_i32_0 = arith.constant 0 : i32
    %2 = arith.cmpi ne, %1, %c0_i32_0 : i32
    scf.if %2 {
      %cst_17 = arith.constant 0.000000e+00 : f32
      %c0_18 = arith.constant 0 : index
      %40 = memref.load %arg5[%c0_18] : memref<2xf32, #tpu.memory_space<smem>>
      memref.store %cst_17, %arg5[%c0_18] : memref<2xf32, #tpu.memory_space<smem>>
      %cst_19 = arith.constant 0.000000e+00 : f32
      %c1_20 = arith.constant 1 : index
      %41 = memref.load %arg5[%c1_20] : memref<2xf32, #tpu.memory_space<smem>>
      memref.store %cst_19, %arg5[%c1_20] : memref<2xf32, #tpu.memory_space<smem>>
    } else {
    }
    %c0 = arith.constant 0 : index
    %c0_1 = arith.constant 0 : index
    %3 = vector.load %arg2[%c0, %c0_1] : memref<8x128xf32, #tpu.memory_space<vmem>>, vector<8x128xf32>
    %c0_2 = arith.constant 0 : index
    %c0_3 = arith.constant 0 : index
    %4 = vector.load %arg1[%c0_2, %c0_3] : memref<8x128xf32, #tpu.memory_space<vmem>>, vector<8x128xf32>
    %c0_4 = arith.constant 0 : index
    %c0_5 = arith.constant 0 : index
    %5 = vector.load %arg3[%c0_4, %c0_5] : memref<128x128xf32, #tpu.memory_space<vmem>>, vector<128x128xf32>
    %6 = math.exp %3 : vector<8x128xf32>
    %cst = arith.constant dense<0.000000e+00> : vector<8x128xf32>
    %7 = tpu.matmul %6, %5, %cst {dimension_numbers = #tpu.dot_dimension_numbers<[1], [0], [0], [1], [0, 0, 1, 1], [], []>} : vector<8x128xf32>, vector<128x128xf32>, vector<8x128xf32> -> vector<8x128xf32>
    %cst_6 = arith.constant 1.000000e+00 : f32
    %8 = vector.broadcast %cst_6 : f32 to vector<128x128xf32>
    %cst_7 = arith.constant dense<0.000000e+00> : vector<8x128xf32>
    %9 = tpu.matmul %6, %8, %cst_7 {dimension_numbers = #tpu.dot_dimension_numbers<[1], [0], [0], [1], [0, 0, 1, 1], [], []>} : vector<8x128xf32>, vector<128x128xf32>, vector<8x128xf32> -> vector<8x128xf32>
    %10 = tpu.iota {dimensions = array<i32: 0>} : vector<8x8xi32>
    %11 = tpu.iota {dimensions = array<i32: 1>} : vector<8x8xi32>
    %12 = arith.cmpi slt, %11, %10 : vector<8x8xi32>
    %13 = arith.extui %12 : vector<8x8xi1> to vector<8x8xi32>
    %14 = arith.sitofp %13 : vector<8x8xi32> to vector<8x8xf32>
    %cst_8 = arith.constant dense<0.000000e+00> : vector<8x128xf32>
    %15 = tpu.matmul %14, %9, %cst_8 {dimension_numbers = #tpu.dot_dimension_numbers<[1], [0], [0], [1], [0, 0, 1, 1], [], []>} : vector<8x8xf32>, vector<8x128xf32>, vector<8x128xf32> -> vector<8x128xf32>
    %16 = arith.addf %7, %15 : vector<8x128xf32>
    %c0_9 = arith.constant 0 : index
    %17 = memref.load %arg5[%c0_9] : memref<2xf32, #tpu.memory_space<smem>>
    %18 = vector.broadcast %17 : f32 to vector<8x128xf32>
    %19 = arith.addf %16, %18 : vector<8x128xf32>
    %20 = math.log %19 : vector<8x128xf32>
    %21 = arith.subf %3, %20 : vector<8x128xf32>
    %22 = arith.mulf %4, %21 : vector<8x128xf32>
    %c1 = arith.constant 1 : index
    %23 = memref.load %arg5[%c1] : memref<2xf32, #tpu.memory_space<smem>>
    %24 = vector.shape_cast %22 : vector<8x128xf32> to vector<1x8x128xf32>
    %cst_10 = arith.constant dense<0.000000e+00> : vector<1xf32>
    %25 = vector.multi_reduction <add>, %24, %cst_10 [1, 2] : vector<1x8x128xf32> to vector<1xf32>
    %26 = vector.shape_cast %25 : vector<1xf32> to vector<1x1x1xf32>
    %27 = vector.extract %26[0, 0, 0] : f32 from vector<1x1x1xf32>
    %28 = arith.subf %23, %27 : f32
    %c1_11 = arith.constant 1 : index
    %29 = memref.load %arg5[%c1_11] : memref<2xf32, #tpu.memory_space<smem>>
    memref.store %28, %arg5[%c1_11] : memref<2xf32, #tpu.memory_space<smem>>
    %c0_12 = arith.constant 0 : index
    %30 = memref.load %arg5[%c0_12] : memref<2xf32, #tpu.memory_space<smem>>
    %31 = vector.shape_cast %6 : vector<8x128xf32> to vector<1x8x128xf32>
    %cst_13 = arith.constant dense<0.000000e+00> : vector<1xf32>
    %32 = vector.multi_reduction <add>, %31, %cst_13 [1, 2] : vector<1x8x128xf32> to vector<1xf32>
    %33 = vector.shape_cast %32 : vector<1xf32> to vector<1x1x1xf32>
    %34 = vector.extract %33[0, 0, 0] : f32 from vector<1x1x1xf32>
    %35 = arith.addf %30, %34 : f32
    %c0_14 = arith.constant 0 : index
    %36 = memref.load %arg5[%c0_14] : memref<2xf32, #tpu.memory_space<smem>>
    memref.store %35, %arg5[%c0_14] : memref<2xf32, #tpu.memory_space<smem>>
    %c0_i32_15 = arith.constant 0 : i32
    %37 = arith.cmpi eq, %arg0, %c0_i32_15 : i32
    %38 = arith.extui %37 : i1 to i32
    %c0_i32_16 = arith.constant 0 : i32
    %39 = arith.cmpi ne, %38, %c0_i32_16 : i32
    scf.if %39 {
      %c1_17 = arith.constant 1 : index
      %40 = memref.load %arg5[%c1_17] : memref<2xf32, #tpu.memory_space<smem>>
      %c0_18 = arith.constant 0 : index
      %c0_19 = arith.constant 0 : index
      %41 = memref.load %arg4[%c0_18, %c0_19] : memref<1x1xf32, #tpu.memory_space<smem>>
      memref.store %40, %arg4[%c0_18, %c0_19] : memref<1x1xf32, #tpu.memory_space<smem>>
    } else {
    }
    return
  }
  func.func @transform_0(%arg0: i32) -> (i32, i32) {
    %c0_i32 = arith.constant 0 : i32
    %c0_i32_0 = arith.constant 0 : i32
    return %arg0, %c0_i32 : i32, i32
  }
  func.func @transform_1(%arg0: i32) -> (i32, i32) {
    %c0_i32 = arith.constant 0 : i32
    %c0_i32_0 = arith.constant 0 : i32
    return %arg0, %c0_i32 : i32, i32
  }
  func.func @transform_2(%arg0: i32) -> (i32, i32) {
    %c0_i32 = arith.constant 0 : i32
    %c0_i32_0 = arith.constant 0 : i32
    %c0_i32_1 = arith.constant 0 : i32
    return %c0_i32, %c0_i32_0 : i32, i32
  }
  func.func @transform_3(%arg0: i32) -> (i32, i32) {
    %c0_i32 = arith.constant 0 : i32
    %c0_i32_0 = arith.constant 0 : i32
    %c0_i32_1 = arith.constant 0 : i32
    return %c0_i32, %c0_i32_0 : i32, i32
  }
}

</mosaic_0001>

<llo_original>
// kernel: tpu_custom_call.1
$region0: #{tpu_custom_call.1}
  #allocation0 [shape = 'u32[]', space=smem, size = 0x4, offset = 0x4, fixed_abs, tag = 'smem constant byte address 0x4 - core index']
  #allocation1 [shape = 'u32[144,128]{1,0:T(1,128)}', space=vmem, size = 0x12000, scoped, tag = 'internal scratch']
  #allocation2 [shape = 'f32[2]{0:T(128)}', space=smem, size = 0x200, scoped, tag = 'scratch operand']
  %s0 = inlined_call_operand.hbm [shape: f32[8,128], index: 0, kind: input, shape index: {}]
  %s1 = inlined_call_operand.hbm [shape: f32[8,128], index: 1, kind: input, shape index: {}]
  %s2 = inlined_call_operand.hbm [shape: f32[128,128], index: 2, kind: input, shape index: {}]
  %s3 = inlined_call_operand.hbm [shape: f32[1,1], index: 3, kind: output, shape index: {}]
  %s4 = sld [smem:[#allocation0]]
  $region42: #{tpu_custom_call.1} parent=0
    _
  %s6 = ssub.s32 1, %s4
  %s7 = scalar_select 0, %s6, %s4
  $region1: #{tpu_custom_call.1} parent=0
    #allocation3 [shape = 'u8[4096]{0}', space=vmem, size = 0x1000, scoped, tag = 'input window, operand 0, single buffered']
    #allocation4 [shape = 's32[1]{0}', space=sflag, size = 0x4, scoped, tag = 'scoped memory for tpu_custom_call.1']
    #allocation5 [shape = 's32[1]{0}', space=sflag, size = 0x4, scoped, tag = 'scoped memory for tpu_custom_call.1']
    #allocation6 [shape = 'u8[4096]{0}', space=vmem, size = 0x1000, scoped, tag = 'input window, operand 1, single buffered']
    #allocation7 [shape = 's32[1]{0}', space=sflag, size = 0x4, scoped, tag = 'scoped memory for tpu_custom_call.1']
    #allocation8 [shape = 'u8[65536]{0}', space=vmem, size = 0x10000, scoped, tag = 'input window, operand 2, single buffered']
    #allocation9 [shape = 'u8[512]{0}', space=smem, size = 0x200, scoped, tag = 'output window, operand 0, single buffered']
    %8 = vsyncpa [#allocation4], 0
    %9 = vsyncpa [#allocation7], 0
    %10 = vsyncpa [#allocation5], 0
    // Predicated region
    $region2: #{tpu_custom_call.1} parent=1 // pred_check
      _
    $region3: #{tpu_custom_call.1} parent=1 // pred_check_branch
      %12 = sbr.rel (0) target = $region5
    $region4: #{tpu_custom_call.1} parent=1 // pred_region
      %s14 = ssub.s32 128, 128
      %15 = vsyncadd [#allocation4], %s14
      %s17 = sshll.u32 [#allocation3], 4
      %s18 = int_to_ptr.vmem [resolvable:$true] %s17
      %20 = dma.hbm_to_vmem [thread:$0]  %s0, 128, %s18, [#allocation4]
    $region5: #{tpu_custom_call.1} parent=1 // pred_fallthru
      _
    // Predicated region
    $region6: #{tpu_custom_call.1} parent=1 // pred_check
      _
    $region7: #{tpu_custom_call.1} parent=1 // pred_check_branch
      %22 = sbr.rel (0) target = $region9
    $region8: #{tpu_custom_call.1} parent=1 // pred_region
      %s24 = ssub.s32 128, 128
      %25 = vsyncadd [#allocation7], %s24
      %s27 = sshll.u32 [#allocation6], 4
      %s28 = int_to_ptr.vmem [resolvable:$true] %s27
      %30 = dma.hbm_to_vmem [thread:$0]  %s1, 128, %s28, [#allocation7]
    $region9: #{tpu_custom_call.1} parent=1 // pred_fallthru
      _
    // Predicated region
    $region10: #{tpu_custom_call.1} parent=1 // pred_check
      _
    $region11: #{tpu_custom_call.1} parent=1 // pred_check_branch
      %32 = sbr.rel (0) target = $region13
    $region12: #{tpu_custom_call.1} parent=1 // pred_region
      %s34 = ssub.s32 2048, 2048
      %35 = vsyncadd [#allocation7], %s34
      %s36 = sshll.u32 [#allocation8], 4
      %s37 = int_to_ptr.vmem [resolvable:$true] %s36
      %42 = dma.hbm_to_vmem [thread:$0]  %s2, 2048, %s37, [#allocation7], 128, 128, 8
    $region13: #{tpu_custom_call.1} parent=1 // pred_fallthru
      _
    // Predicated region
    $region14: #{tpu_custom_call.1} parent=1 // pred_check
      _
    $region15: #{tpu_custom_call.1} parent=1 // pred_check_branch
      %44 = sbr.rel (0) target = $region17
    $region16: #{tpu_custom_call.1} parent=1 // pred_region
      %45 = dma.done [#allocation4], 128
    $region17: #{tpu_custom_call.1} parent=1 // pred_fallthru
      _
    // Predicated region
    $region18: #{tpu_custom_call.1} parent=1 // pred_check
      _
    $region19: #{tpu_custom_call.1} parent=1 // pred_check_branch
      %47 = sbr.rel (0) target = $region21
    $region20: #{tpu_custom_call.1} parent=1 // pred_region
      %48 = dma.done [#allocation7], 128
    $region21: #{tpu_custom_call.1} parent=1 // pred_fallthru
      _
    // Predicated region
    $region22: #{tpu_custom_call.1} parent=1 // pred_check
      _
    $region23: #{tpu_custom_call.1} parent=1 // pred_check_branch
      %50 = sbr.rel (0) target = $region25
    $region24: #{tpu_custom_call.1} parent=1 // pred_region
      %51 = dma.done [#allocation7], 2048
    $region25: #{tpu_custom_call.1} parent=1 // pred_fallthru
      _
    %p52 = scmp.eq.s32.totalorder 0, 0
    // Predicated region
    $region26: #{tpu_custom_call.1} parent=1 // pred_check
      %p53 = pneg %p52
    $region27: #{tpu_custom_call.1} parent=1 // pred_check_branch
      %55 = sbr.rel (%p53) target = $region29
    $region28: #{tpu_custom_call.1} parent=1 // pred_region
      %s56 = scalar_lea.smem [#allocation2], 0
      %57 = sst [smem:[%s56]] 0.0
      %s58 = scalar_lea.smem [#allocation2], 1
      %59 = sst [smem:[%s58]] 0.0
    $region29: #{tpu_custom_call.1} parent=1 // pred_fallthru
      _
    %v60 = vld [vmem:[#allocation6] sm:$0xff]
    %v61 = vld [vmem:[#allocation3] sm:$0xff]
    %v62 = vld [vmem:[#allocation8] sm:$0xff]
    %v63 = vld [vmem:[#allocation8 + $0x8] sm:$0xff]
    %v64 = vld [vmem:[#allocation8 + $0x10] sm:$0xff]
    %v65 = vld [vmem:[#allocation8 + $0x18] sm:$0xff]
    %v66 = vld [vmem:[#allocation8 + $0x20] sm:$0xff]
    %v67 = vld [vmem:[#allocation8 + $0x28] sm:$0xff]
    %v68 = vld [vmem:[#allocation8 + $0x30] sm:$0xff]
    %v69 = vld [vmem:[#allocation8 + $0x38] sm:$0xff]
    %v70 = vld [vmem:[#allocation8 + $0x40] sm:$0xff]
    %v71 = vld [vmem:[#allocation8 + $0x48] sm:$0xff]
    %v72 = vld [vmem:[#allocation8 + $0x50] sm:$0xff]
    %v73 = vld [vmem:[#allocation8 + $0x58] sm:$0xff]
    %v74 = vld [vmem:[#allocation8 + $0x60] sm:$0xff]
    %v75 = vld [vmem:[#allocation8 + $0x68] sm:$0xff]
    %v76 = vld [vmem:[#allocation8 + $0x70] sm:$0xff]
    %v77 = vld [vmem:[#allocation8 + $0x78] sm:$0xff]
    %v78 = vmul.f32 %v60, 1.442695
    %v79 = vpow.pop %v78
    %80 = vmatprep.subr.mxu0 0.0
    %81 = vmatpush1.msra.mxu0 1.0
    %82 = vmatprep.subr.mxu0 0.0
    %83 = vmatpush1.msra.mxu0 1.0
    %84 = vmatprep.subr.mxu0 0.0
    %85 = vmatpush1.msra.mxu0 1.0
    %86 = vmatprep.subr.mxu0 0.0
    %87 = vmatpush1.msra.mxu0 1.0
    %88 = vmatprep.subr.mxu0 0.0
    %89 = vmatpush1.msra.mxu0 1.0
    %90 = vmatprep.subr.mxu0 0.0
    %91 = vmatpush1.msra.mxu0 1.0
    %92 = vmatprep.subr.mxu0 0.0
    %93 = vmatpush1.msra.mxu0 1.0
    %94 = vmatprep.subr.mxu0 0.0
    %95 = vmatpush1.msra.mxu0 1.0
    %96 = vmatprep.subr.mxu0 0.0
    %97 = vmatpush1.msra.mxu0 1.0
    %98 = vmatprep.subr.mxu0 0.0
    %99 = vmatpush1.msra.mxu0 1.0
    %100 = vmatprep.subr.mxu0 0.0
    %101 = vmatpush1.msra.mxu0 1.0
    %102 = vmatprep.subr.mxu0 0.0
    %103 = vmatpush1.msra.mxu0 1.0
    %104 = vmatprep.subr.mxu0 0.0
    %105 = vmatpush1.msra.mxu0 1.0
    %106 = vmatprep.subr.mxu0 0.0
    %107 = vmatpush1.msra.mxu0 1.0
    %108 = vmatprep.subr.mxu0 0.0
    %109 = vmatpush1.msra.mxu0 1.0
    %110 = vmatprep.subr.mxu0 0.0
    %111 = vmatpush1.msra.mxu0 1.0
    %112 = vmatprep.subr.mxu0 0.0
    %113 = vmatpush1.msra.mxu0 0.0
    %114 = vmatprep.subr.mxu0 0.0
    %115 = vmatpush1.msra.mxu0 0.0
    %116 = vmatprep.subr.mxu0 0.0
    %117 = vmatpush1.msra.mxu0 0.0
    %118 = vmatprep.subr.mxu0 0.0
    %119 = vmatpush1.msra.mxu0 0.0
    %120 = vmatprep.subr.mxu0 0.0
    %121 = vmatpush1.msra.mxu0 0.0
    %122 = vmatprep.subr.mxu0 0.0
    %123 = vmatpush1.msra.mxu0 0.0
    %124 = vmatprep.subr.mxu0 0.0
    %125 = vmatpush1.msra.mxu0 0.0
    %126 = vmatprep.subr.mxu0 0.0
    %127 = vmatpush1.msra.mxu0 0.0
    %128 = vmatprep.subr.mxu0 0.0
    %129 = vmatpush1.msra.mxu0 0.0
    %130 = vmatprep.subr.mxu0 0.0
    %131 = vmatpush1.msra.mxu0 0.0
    %132 = vmatprep.subr.mxu0 0.0
    %133 = vmatpush1.msra.mxu0 0.0
    %134 = vmatprep.subr.mxu0 0.0
    %135 = vmatpush1.msra.mxu0 0.0
    %136 = vmatprep.subr.mxu0 0.0
    %137 = vmatpush1.msra.mxu0 0.0
    %138 = vmatprep.subr.mxu0 0.0
    %139 = vmatpush1.msra.mxu0 0.0
    %140 = vmatprep.subr.mxu0 0.0
    %141 = vmatpush1.msra.mxu0 0.0
    %142 = vmatprep.subr.mxu0 0.0
    %143 = vmatpush1.msra.mxu0 0.0
    %144 = vmatprep.mubr.f32.mxu0 0.0
    %145 = vmatmul.mubr.f32.gmra.mrb[0].mxu0 %v79
    %v146 = vpop.f32.mrb[0].mxu0
    %v147 = vadd.f32 0.0, %v146
    %v148 = vpop.f32.mrb[0].mxu0
    %149 = vdwg.mxu0
    %v150 = vlaneseq
    %v151 = vshrl.u32 %v150, 7
    %v152 = vlaneseq
    %v153 = vand.u32 %v152, 127
    %vm154 = vcmp.lt.s32.totalorder %v153, %v151
    %v155 = vsel %vm154, 1, 0
    %v156 = vcvt.s32.f32 %v155
    %vm157 = vcmask 64512
    %v159 = vsel %vm157, %v156, 0
    %161 = vmatprep.subr.mxu0 0.0
    %162 = vmatpush1.msra.mxu0 %v147
    %163 = vmatprep.subr.mxu0 0.0
    %164 = vmatpush1.msra.mxu0 0.0
    %165 = vmatprep.subr.mxu0 0.0
    %166 = vmatpush1.msra.mxu0 0.0
    %167 = vmatprep.subr.mxu0 0.0
    %168 = vmatpush1.msra.mxu0 0.0
    %169 = vmatprep.subr.mxu0 0.0
    %170 = vmatpush1.msra.mxu0 0.0
    %171 = vmatprep.subr.mxu0 0.0
    %172 = vmatpush1.msra.mxu0 0.0
    %173 = vmatprep.subr.mxu0 0.0
    %174 = vmatpush1.msra.mxu0 0.0
    %175 = vmatprep.subr.mxu0 0.0
    %176 = vmatpush1.msra.mxu0 0.0
    %177 = vmatprep.subr.mxu0 0.0
    %178 = vmatpush1.msra.mxu0 0.0
    %179 = vmatprep.subr.mxu0 0.0
    %180 = vmatpush1.msra.mxu0 0.0
    %181 = vmatprep.subr.mxu0 0.0
    %182 = vmatpush1.msra.mxu0 0.0
    %183 = vmatprep.subr.mxu0 0.0
    %184 = vmatpush1.msra.mxu0 0.0
    %185 = vmatprep.subr.mxu0 0.0
    %186 = vmatpush1.msra.mxu0 0.0
    %187 = vmatprep.subr.mxu0 0.0
    %188 = vmatpush1.msra.mxu0 0.0
    %189 = vmatprep.subr.mxu0 0.0
    %190 = vmatpush1.msra.mxu0 0.0
    %191 = vmatprep.subr.mxu0 0.0
    %192 = vmatpush1.msra.mxu0 0.0
    %193 = vmatprep.subr.mxu0 0.0
    %194 = vmatpush1.msra.mxu0 0.0
    %195 = vmatprep.subr.mxu0 0.0
    %196 = vmatpush1.msra.mxu0 0.0
    %197 = vmatprep.subr.mxu0 0.0
    %198 = vmatpush1.msra.mxu0 0.0
    %199 = vmatprep.subr.mxu0 0.0
    %200 = vmatpush1.msra.mxu0 0.0
    %201 = vmatprep.subr.mxu0 0.0
    %202 = vmatpush1.msra.mxu0 0.0
    %203 = vmatprep.subr.mxu0 0.0
    %204 = vmatpush1.msra.mxu0 0.0
    %205 = vmatprep.subr.mxu0 0.0
    %206 = vmatpush1.msra.mxu0 0.0
    %207 = vmatprep.subr.mxu0 0.0
    %208 = vmatpush1.msra.mxu0 0.0
    %209 = vmatprep.subr.mxu0 0.0
    %210 = vmatpush1.msra.mxu0 0.0
    %211 = vmatprep.subr.mxu0 0.0
    %212 = vmatpush1.msra.mxu0 0.0
    %213 = vmatprep.subr.mxu0 0.0
    %214 = vmatpush1.msra.mxu0 0.0
    %215 = vmatprep.subr.mxu0 0.0
    %216 = vmatpush1.msra.mxu0 0.0
    %217 = vmatprep.subr.mxu0 0.0
    %218 = vmatpush1.msra.mxu0 0.0
    %219 = vmatprep.subr.mxu0 0.0
    %220 = vmatpush1.msra.mxu0 0.0
    %221 = vmatprep.subr.mxu0 0.0
    %222 = vmatpush1.msra.mxu0 0.0
    %223 = vmatprep.subr.mxu0 0.0
    %224 = vmatpush1.msra.mxu0 0.0
    %225 = vmatprep.mubr.f32.mxu0 0.0
    %226 = vmatmul.mubr.f32.gmra.mrb[0].mxu0 %v159
    %v227 = vpop.f32.mrb[0].mxu0
    %v228 = vadd.f32 0.0, %v227
    %v229 = vpop.f32.mrb[0].mxu0
    %230 = vdwg.mxu0
    %231 = vmatprep.subr.mxu0 0.0
    %232 = vmatpush1.msra.mxu0 %v62
    %233 = vmatprep.subr.mxu0 0.0
    %234 = vmatpush1.msra.mxu0 %v63
    %235 = vmatprep.subr.mxu0 0.0
    %236 = vmatpush1.msra.mxu0 %v64
    %237 = vmatprep.subr.mxu0 0.0
    %238 = vmatpush1.msra.mxu0 %v65
    %239 = vmatprep.subr.mxu0 0.0
    %240 = vmatpush1.msra.mxu0 %v66
    %241 = vmatprep.subr.mxu0 0.0
    %242 = vmatpush1.msra.mxu0 %v67
    %243 = vmatprep.subr.mxu0 0.0
    %244 = vmatpush1.msra.mxu0 %v68
    %245 = vmatprep.subr.mxu0 0.0
    %246 = vmatpush1.msra.mxu0 %v69
    %247 = vmatprep.subr.mxu0 0.0
    %248 = vmatpush1.msra.mxu0 %v70
    %249 = vmatprep.subr.mxu0 0.0
    %250 = vmatpush1.msra.mxu0 %v71
    %251 = vmatprep.subr.mxu0 0.0
    %252 = vmatpush1.msra.mxu0 %v72
    %253 = vmatprep.subr.mxu0 0.0
    %254 = vmatpush1.msra.mxu0 %v73
    %255 = vmatprep.subr.mxu0 0.0
    %256 = vmatpush1.msra.mxu0 %v74
    %257 = vmatprep.subr.mxu0 0.0
    %258 = vmatpush1.msra.mxu0 %v75
    %259 = vmatprep.subr.mxu0 0.0
    %260 = vmatpush1.msra.mxu0 %v76
    %261 = vmatprep.subr.mxu0 0.0
    %262 = vmatpush1.msra.mxu0 %v77
    %263 = vmatprep.subr.mxu0 0.0
    %264 = vmatpush1.msra.mxu0 0.0
    %265 = vmatprep.subr.mxu0 0.0
    %266 = vmatpush1.msra.mxu0 0.0
    %267 = vmatprep.subr.mxu0 0.0
    %268 = vmatpush1.msra.mxu0 0.0
    %269 = vmatprep.subr.mxu0 0.0
    %270 = vmatpush1.msra.mxu0 0.0
    %271 = vmatprep.subr.mxu0 0.0
    %272 = vmatpush1.msra.mxu0 0.0
    %273 = vmatprep.subr.mxu0 0.0
    %274 = vmatpush1.msra.mxu0 0.0
    %275 = vmatprep.subr.mxu0 0.0
    %276 = vmatpush1.msra.mxu0 0.0
    %277 = vmatprep.subr.mxu0 0.0
    %278 = vmatpush1.msra.mxu0 0.0
    %279 = vmatprep.subr.mxu0 0.0
    %280 = vmatpush1.msra.mxu0 0.0
    %281 = vmatprep.subr.mxu0 0.0
    %282 = vmatpush1.msra.mxu0 0.0
    %283 = vmatprep.subr.mxu0 0.0
    %284 = vmatpush1.msra.mxu0 0.0
    %285 = vmatprep.subr.mxu0 0.0
    %286 = vmatpush1.msra.mxu0 0.0
    %287 = vmatprep.subr.mxu0 0.0
    %288 = vmatpush1.msra.mxu0 0.0
    %289 = vmatprep.subr.mxu0 0.0
    %290 = vmatpush1.msra.mxu0 0.0
    %291 = vmatprep.subr.mxu0 0.0
    %292 = vmatpush1.msra.mxu0 0.0
    %293 = vmatprep.subr.mxu0 0.0
    %294 = vmatpush1.msra.mxu0 0.0
    %295 = vmatprep.mubr.f32.mxu0 0.0
    %296 = vmatmul.mubr.f32.gmra.mrb[0].mxu0 %v79
    %v297 = vpop.f32.mrb[0].mxu0
    %v298 = vadd.f32 %v228, %v297
    %v299 = vpop.f32.mrb[0].mxu0
    %300 = vdwg.mxu0
    %s301 = sld [smem:[#allocation2]]
    %v302 = vstv %s301
    %v303 = vadd.f32 %v298, %v302
    %v304 = vlog2.pop %v303
    %v305 = vmul.f32 %v304, 0.6931472
    %v306 = vsub.f32 %v60, %v305
    %v307 = vmul.f32 %v61, %v306
    %s308 = sld [smem:[#allocation2 + $0x1]]
    %309 = vadd.xlane.f32.xlu0 %v307
    %v310 = vpop.xlane.xlu0 %309
    %v311 = vrot.slane %v310, 4
    %v312 = vadd.f32 %v310, %v311
    %v313 = vrot.slane %v312, 2
    %v314 = vadd.f32 %v312, %v313
    %v315 = vrot.slane %v314, 1
    %v316 = vadd.f32 %v314, %v315
    %s317 = vtos %v316
    %s318 = ssub.f32 %s308, %s317
    %s319 = scalar_lea.smem [#allocation2], 1
    %320 = sst [smem:[%s319]] %s318
    %s321 = sld [smem:[#allocation2]]
    %322 = vadd.xlane.f32.xlu0 %v79
    %v323 = vpop.xlane.xlu0 %322
    %v324 = vrot.slane %v323, 4
    %v325 = vadd.f32 %v323, %v324
    %v326 = vrot.slane %v325, 2
    %v327 = vadd.f32 %v325, %v326
    %v328 = vrot.slane %v327, 1
    %v329 = vadd.f32 %v327, %v328
    %s330 = vtos %v329
    %s331 = sadd.f32 %s321, %s330
    %s332 = scalar_lea.smem [#allocation2], 0
    %333 = sst [smem:[%s332]] %s331
    // Predicated region
    $region30: #{tpu_custom_call.1} parent=1 // pred_check
      %p334 = pneg %p52
    $region31: #{tpu_custom_call.1} parent=1 // pred_check_branch
      %336 = sbr.rel (%p334) target = $region33
    $region32: #{tpu_custom_call.1} parent=1 // pred_region
      %s337 = sld [smem:[#allocation2 + $0x1]]
      %s338 = scalar_lea.smem [#allocation9], 0
      %339 = sst [smem:[%s338]] %s337
    $region33: #{tpu_custom_call.1} parent=1 // pred_fallthru
      _
    // Predicated region
    $region34: #{tpu_custom_call.1} parent=1 // pred_check
      _
    $region35: #{tpu_custom_call.1} parent=1 // pred_check_branch
      %341 = sbr.rel (0) target = $region37
    $region36: #{tpu_custom_call.1} parent=1 // pred_region
      %s343 = ssub.s32 16, 16
      %344 = vsyncadd [#allocation5], %s343
      %347 = dma.smem_to_hbm [#allocation9], 16, %s3, [#allocation5]
    $region37: #{tpu_custom_call.1} parent=1 // pred_fallthru
      _
    // Predicated region
    $region38: #{tpu_custom_call.1} parent=1 // pred_check
      _
    $region39: #{tpu_custom_call.1} parent=1 // pred_check_branch
      %349 = sbr.rel (0) target = $region41
    $region40: #{tpu_custom_call.1} parent=1 // pred_region
      %350 = dma.done [#allocation5], 16
    $region41: #{tpu_custom_call.1} parent=1 // pred_fallthru
      _
    %351 = sfence
    %352 = vsyncpa [#allocation4], 1
    %353 = vsyncpa [#allocation7], 1
    %354 = vsyncpa [#allocation5], 1

</llo_original>
